<compile_context>
chip_gen: v6e
topology: v6e:2x2x1
jax: 0.10.0
libtpu: 0.0.40
codegen_flags: <defaults>
</compile_context>

<pallas_src>
import jax
import jax.numpy as jnp
from jax.experimental import pallas as pl
from jax.experimental.pallas import tpu as pltpu


_PARAM_COLS = 8      # 7 used + 1 padding lane -> a single (tn, 8) DMA per row tile
_MAX_TF = 2048       # cap on frequency-tile width (lane-dense, multiple of 128)
_MAX_TN = 1024       # cap on row-tile height


def _round_up(x, m):
    return ((x + m - 1) // m) * m


def _vmem_capacity_bytes():
    try:
        return int(pltpu.get_tpu_info().vmem_capacity_bytes)
    except Exception:
        return 64 * 1024 * 1024          # conservative (v7x-sized) fallback


def _tile_config(n, fdim):
    """Pick (tn, tf, vmem_limit) from the chip's VMEM and the problem size."""
    vmem = _vmem_capacity_bytes()
    if vmem >= 96 * 1024 * 1024:         # v5e / v6e: 128 MiB physical VMEM
        max_tile_bytes = 8 * 1024 * 1024
        vmem_limit = 96 * 1024 * 1024
    else:                                # v7x: 64 MiB physical VMEM -> keep the
        max_tile_bytes = 2 * 1024 * 1024 # double-buffered output plus the ~4 live
        vmem_limit = 32 * 1024 * 1024    # (tn, tf) temporaries well inside it

    tf = min(_round_up(fdim, 128), _MAX_TF)
    tn = min(max_tile_bytes // (tf * 4), _MAX_TN, _round_up(n, 8))
    tn = max(8, (tn // 8) * 8)

    # Megacore: v7x has 2 TensorCores; make sure the parallel grid has >= 2 blocks
    # so both cores get work even for small-N / single-row-tile problems.
    if pl.cdiv(n, tn) * pl.cdiv(fdim, tf) < 2:
        if fdim > 128:
            tf = _round_up(pl.cdiv(fdim, 2), 128)
        elif n > 8:
            tn = max(8, _round_up(pl.cdiv(n, 2), 8))
    return tn, tf, vmem_limit


def _double_lorentzian_kernel(p_ref, f_ref, out_ref):
    p = p_ref[...]                      # (tn, 8) per-row constants (precomputed)
    i0     = p[:, 0:1]                  # I0
    a2     = p[:, 1:2]                  # 2*A
    inv_w2 = p[:, 2:3]                  # 1 / width^2
    fc     = p[:, 3:4]                  # f_center
    b      = p[:, 4:5]                  # 2*(1 - h^2)
    c      = p[:, 5:6]                  # (1 + h^2)^2
    n0     = p[:, 6:7]                  # 2*A*(1 + h^2)

    f = f_ref[...]                      # (1, tf)

    t   = fc - f                        # (tn, tf)
    x   = (t * t) * inv_w2              # ((f_c - f)/w)^2
    den = x * (x + b) + c               # == (1+(u-h)^2)(1+(u+h)^2) >= 1

    # EUP approximate reciprocal + one Newton step (restores ~f32 accuracy while
    # keeping the divide off the VALU slots).
    r = pl.reciprocal(den, approx=True)
    r = r * (2.0 - den * r)

    out_ref[...] = i0 - (a2 * x + n0) * r       # I0 - (L1 + L2)


def double_lorentzian_forward(log_i0, log_a, log_width, log_f_center,
                              log_f_delta, f):
    """Pallas implementation of DoubleLorentzianModel.forward.

    log_* : (N, 1) float32 parameters (stored in log-space, like the module)
    f     : 1-D (F,) float32 frequency array (or anything reshaping to (1, F))
    returns (N, F) float32
    """
    f2 = f.reshape(-1, f.shape[-1]).astype(jnp.float32)   # (1, F)
    if f2.shape[0] != 1:
        raise ValueError("kernel assumes f broadcasts as (1, F)")
    n = log_i0.shape[0]
    fdim = f2.shape[1]

    # Per-row derived constants, computed once on the tiny (N,) params (O(N) work,
    # negligible next to the (N, F) output) and packed so each row tile is a single
    # DMA and the kernel re-does no exp / per-row algebra per f-tile.
    li0 = log_i0.reshape(-1).astype(jnp.float32)
    la  = log_a.reshape(-1).astype(jnp.float32)
    lw  = log_width.reshape(-1).astype(jnp.float32)
    lfc = log_f_center.reshape(-1).astype(jnp.float32)
    lfd = log_f_delta.reshape(-1).astype(jnp.float32)

    i0 = jnp.exp(li0)
    a2 = 2.0 * jnp.exp(la)
    inv_w2 = jnp.exp(-2.0 * lw)                 # 1 / width^2
    fc = jnp.exp(lfc)
    h2 = 0.25 * jnp.exp(2.0 * (lfd - lw))       # (0.5 * f_delta / width)^2
    b = 2.0 * (1.0 - h2)
    c = (1.0 + h2) * (1.0 + h2)
    n0 = a2 * (1.0 + h2)
    packed = jnp.stack(
        [i0, a2, inv_w2, fc, b, c, n0, jnp.zeros_like(i0)], axis=-1)   # (N, 8)

    tn, tf, vmem_limit = _tile_config(n, fdim)
    grid = (pl.cdiv(n, tn), pl.cdiv(fdim, tf))

    # True-shaped output: no padding, no post-kernel slice.  Edge blocks are
    # masked by Pallas; every output element depends only on its own lane/row,
    # so garbage lanes/rows in edge input blocks are harmless.
    return pl.pallas_call(
        _double_lorentzian_kernel,
        out_shape=jax.ShapeDtypeStruct((n, fdim), jnp.float32),
        grid_spec=pltpu.PrefetchScalarGridSpec(
            num_scalar_prefetch=0,
            grid=grid,
            in_specs=[
                pl.BlockSpec((tn, _PARAM_COLS), lambda i, j: (i, 0)),
                pl.BlockSpec((1, tf), lambda i, j: (0, j)),
            ],
            out_specs=pl.BlockSpec((tn, tf), lambda i, j: (i, j)),
        ),
        compiler_params=pltpu.CompilerParams(
            dimension_semantics=("parallel", "parallel"),
            vmem_limit_bytes=vmem_limit,
        ),
    )(packed, f2)


def _reference_forward(log_i0, log_a, log_width, log_f_center, log_f_delta, f):
    i0 = jnp.exp(log_i0)
    a = jnp.exp(log_a)
    width = jnp.exp(log_width)
    fc = jnp.exp(log_f_center)
    fd = jnp.exp(log_f_delta)
    f2 = f.reshape(-1, f.shape[-1])
    l1 = a / (1 + ((fc - 0.5 * fd - f2) / width) ** 2)
    l2 = a / (1 + ((fc + 0.5 * fd - f2) / width) ** 2)
    return i0 - (l1 + l2)


if __name__ == "__main__":
    key = jax.random.PRNGKey(0)
    n = 6        # number of independent double-dip fits (not a multiple of 8:
                 # exercises the masked row edge block)
    fdim = 200   # number of frequency samples (not a multiple of 128:
                 # exercises the masked lane edge block)

    k1, k2, k3, k4, k5 = jax.random.split(key, 5)
    # Deterministic positive initial parameters (the module stores their logs).
    i0 = 1.0 + 0.1 * jax.random.uniform(k1, (n, 1), jnp.float32)
    a = 0.3 + 0.1 * jax.random.uniform(k2, (n, 1), jnp.float32)
    width = 0.02 + 0.01 * jax.random.uniform(k3, (n, 1), jnp.float32)
    f_center = 2.87 + 0.01 * jax.random.uniform(k4, (n, 1), jnp.float32)
    f_delta = 0.05 + 0.02 * jax.random.uniform(k5, (n, 1), jnp.float32)

    log_i0 = jnp.log(i0)
    log_a = jnp.log(a)
    log_width = jnp.log(width)
    log_f_center = jnp.log(f_center)
    log_f_delta = jnp.log(f_delta)

    # Frequency axis (1-D), like an ODMR sweep.
    f = jnp.linspace(2.7, 3.0, fdim, dtype=jnp.float32)

    out = double_lorentzian_forward(log_i0, log_a, log_width,
                                    log_f_center, log_f_delta, f)
    out = jax.block_until_ready(out)

    ref = _reference_forward(log_i0, log_a, log_width,
                             log_f_center, log_f_delta, f)
    assert out.shape == (n, fdim)
    assert jnp.allclose(out, ref, rtol=1e-5, atol=1e-5)
    print("KERNEL_OK")
</pallas_src>

<mosaic_0001>
module attributes {stable_mosaic.version = 11 : i64} {
  func.func @_double_lorentzian_kernel(%arg0: i32, %arg1: i32, %arg2: memref<8x8xf32, #tpu.memory_space<vmem>>, %arg3: memref<1x128xf32, #tpu.memory_space<vmem>>, %arg4: memref<8x128xf32, #tpu.memory_space<vmem>>) attributes {dimension_semantics = [#tpu.dimension_semantics<parallel>, #tpu.dimension_semantics<parallel>], iteration_bounds = array<i64: 1, 2>, scalar_prefetch = 0 : i64, scratch_operands = 0 : i64, tpu.core_type = #tpu.core_type<tc>, window_params = [{transform_indices = @transform_0, window_bounds = array<i64: 8, 8>}, {transform_indices = @transform_1, window_bounds = array<i64: 1, 128>}, {transform_indices = @transform_2, window_bounds = array<i64: 8, 128>}]} {
    %c0 = arith.constant 0 : index
    %c0_0 = arith.constant 0 : index
    %0 = vector.load %arg2[%c0, %c0_0] : memref<8x8xf32, #tpu.memory_space<vmem>>, vector<8x8xf32>
    %1 = vector.extract_strided_slice %0 {offsets = [0, 0], sizes = [8, 1], strides = [1, 1]} : vector<8x8xf32> to vector<8x1xf32>
    %2 = vector.extract_strided_slice %0 {offsets = [0, 1], sizes = [8, 1], strides = [1, 1]} : vector<8x8xf32> to vector<8x1xf32>
    %3 = vector.extract_strided_slice %0 {offsets = [0, 2], sizes = [8, 1], strides = [1, 1]} : vector<8x8xf32> to vector<8x1xf32>
    %4 = vector.extract_strided_slice %0 {offsets = [0, 3], sizes = [8, 1], strides = [1, 1]} : vector<8x8xf32> to vector<8x1xf32>
    %5 = vector.extract_strided_slice %0 {offsets = [0, 4], sizes = [8, 1], strides = [1, 1]} : vector<8x8xf32> to vector<8x1xf32>
    %6 = vector.extract_strided_slice %0 {offsets = [0, 5], sizes = [8, 1], strides = [1, 1]} : vector<8x8xf32> to vector<8x1xf32>
    %7 = vector.extract_strided_slice %0 {offsets = [0, 6], sizes = [8, 1], strides = [1, 1]} : vector<8x8xf32> to vector<8x1xf32>
    %c0_1 = arith.constant 0 : index
    %c0_2 = arith.constant 0 : index
    %8 = vector.load %arg3[%c0_1, %c0_2] : memref<1x128xf32, #tpu.memory_space<vmem>>, vector<1x128xf32>
    %9 = vector.broadcast %4 : vector<8x1xf32> to vector<8x128xf32>
    %10 = vector.broadcast %8 : vector<1x128xf32> to vector<8x128xf32>
    %11 = arith.subf %9, %10 : vector<8x128xf32>
    %12 = arith.mulf %11, %11 : vector<8x128xf32>
    %13 = vector.broadcast %3 : vector<8x1xf32> to vector<8x128xf32>
    %14 = arith.mulf %12, %13 : vector<8x128xf32>
    %15 = vector.broadcast %5 : vector<8x1xf32> to vector<8x128xf32>
    %16 = arith.addf %14, %15 : vector<8x128xf32>
    %17 = arith.mulf %14, %16 : vector<8x128xf32>
    %18 = vector.broadcast %6 : vector<8x1xf32> to vector<8x128xf32>
    %19 = arith.addf %17, %18 : vector<8x128xf32>
    %20 = tpu.reciprocal %19 {approx = true} : vector<8x128xf32> -> vector<8x128xf32>
    %21 = arith.mulf %19, %20 : vector<8x128xf32>
    %cst = arith.constant 2.000000e+00 : f32
    %22 = vector.broadcast %cst : f32 to vector<8x128xf32>
    %23 = arith.subf %22, %21 : vector<8x128xf32>
    %24 = arith.mulf %20, %23 : vector<8x128xf32>
    %25 = vector.broadcast %2 : vector<8x1xf32> to vector<8x128xf32>
    %26 = arith.mulf %25, %14 : vector<8x128xf32>
    %27 = vector.broadcast %7 : vector<8x1xf32> to vector<8x128xf32>
    %28 = arith.addf %26, %27 : vector<8x128xf32>
    %29 = arith.mulf %28, %24 : vector<8x128xf32>
    %30 = vector.broadcast %1 : vector<8x1xf32> to vector<8x128xf32>
    %31 = arith.subf %30, %29 : vector<8x128xf32>
    %c0_3 = arith.constant 0 : index
    %c0_4 = arith.constant 0 : index
    %32 = vector.load %arg4[%c0_3, %c0_4] : memref<8x128xf32, #tpu.memory_space<vmem>>, vector<8x128xf32>
    tpu.vector_store %arg4[%c0_3, %c0_4], %31 {strides = array<i32>} : memref<8x128xf32, #tpu.memory_space<vmem>>, vector<8x128xf32>,
    return
  }
  func.func @transform_0(%arg0: i32, %arg1: i32) -> (i32, i32) {
    %c0_i32 = arith.constant 0 : i32
    %c0_i32_0 = arith.constant 0 : i32
    return %arg0, %c0_i32 : i32, i32
  }
  func.func @transform_1(%arg0: i32, %arg1: i32) -> (i32, i32) {
    %c0_i32 = arith.constant 0 : i32
    %c0_i32_0 = arith.constant 0 : i32
    return %c0_i32, %arg1 : i32, i32
  }
  func.func @transform_2(%arg0: i32, %arg1: i32) -> (i32, i32) {
    %c0_i32 = arith.constant 0 : i32
    return %arg0, %arg1 : i32, i32
  }
}

</mosaic_0001>

<llo_original>
// kernel: tpu_custom_call.1
$region0: #{tpu_custom_call.1}
  #allocation0 [shape = 'u32[]', space=smem, size = 0x4, offset = 0x4, fixed_abs, tag = 'smem constant byte address 0x4 - core index']
  #allocation1 [shape = 'u32[144,128]{1,0:T(1,128)}', space=vmem, size = 0x12000, scoped, tag = 'internal scratch']
  %s0 = inlined_call_operand.hbm [shape: f32[6,8], index: 0, kind: input, shape index: {}]
  %s1 = inlined_call_operand.hbm [shape: f32[1,200], index: 1, kind: input, shape index: {}]
  %s2 = inlined_call_operand.hbm [shape: f32[6,200], index: 2, kind: output, shape index: {}]
  %s3 = sld [smem:[#allocation0]]
  $region49: #{tpu_custom_call.1} parent=0
    _
  %s5 = ssub.s32 1, %s3
  %s6 = scalar_select 0, %s5, %s3
  $region1: #{tpu_custom_call.1} parent=0
    #allocation2 [shape = 'u8[4096]{0}', space=vmem, size = 0x1000, scoped, tag = 'input window, operand 0, single buffered']
    #allocation3 [shape = 's32[2]{0}', space=sflag, size = 0x8, scoped, tag = 'scoped memory for tpu_custom_call.1']
    #allocation4 [shape = 's32[2]{0}', space=sflag, size = 0x8, scoped, tag = 'scoped memory for tpu_custom_call.1']
    #allocation5 [shape = 'u8[1024]{0}', space=vmem, size = 0x400, scoped, tag = 'input window, operand 1']
    #allocation6 [shape = 's32[2]{0}', space=sflag, size = 0x8, scoped, tag = 'scoped memory for tpu_custom_call.1']
    #allocation7 [shape = 'u8[8192]{0}', space=vmem, size = 0x2000, scoped, tag = 'output window, operand 0']
    %7 = vsyncpa [#allocation3], 0
    %8 = vsyncpa [#allocation6], 0
    %s9 = scalar_lea.sflag [#allocation6], 1
    %10 = vsyncpa %s9, 0
    %11 = vsyncpa [#allocation4], 0
    %s12 = scalar_lea.sflag [#allocation4], 1
    %13 = vsyncpa %s12, 0
    loop: start=0, step=1, limit=4
    $region2: #{tpu_custom_call.1} parent=1 // loop_pre_header
      _
    $region3: #{tpu_custom_call.1} parent=1 // loop_header
      %s15 = sphi 0, %s19
      %p16 = scmp.ge.s32.totalorder %s15, 4
      %s22 = sphi 0, %s34
      %s23 = sphi 0, %s30
      %s24 = sphi 0, %s22
      %s25 = sphi 0, %s23
      %s26 = sphi 0, %s24
      %s27 = sphi 0, %s25
      %s37 = sphi 0, %s39
      %s40 = sphi 0, %s37
      %s41 = sphi 0, %s40
      %s57 = sphi 0, %s41
      %s63 = sphi 0, %s65
      %s66 = sphi 0, %s63
      %s67 = sphi 0, %s66
      %s83 = sphi 0, %s67
      %s91 = sphi 0, %s93
      %s94 = sphi 0, %s91
      %s95 = sphi 0, %s94
      %s111 = sphi 0, %s95
    $region4: #{tpu_custom_call.1} parent=1 // loop_header_branch
      %18 = sbr.rel (%p16) target = $region8
    $region5: #{tpu_custom_call.1} parent=1 // loop_body
      %s20 = ssub.s32 %s15, 1
      %s21 = ssub.s32 %s15, 2
      %s28 = sadd.s32 1, %s23
      %p29 = scmp.ge.s32.totalorder %s28, 2
      %s30 = scalar_select %p29, 0, %s28
      %s31 = sadd.s32 1, %s22
      %s32 = scalar_select %p29, %s31, %s22
      %p33 = scmp.ge.s32.totalorder %s32, 1
      %s34 = scalar_select %p33, 0, %s32
      %s35 = ssub.s32 %s22, %s34
      %p36 = scmp.eq.s32.totalorder %s35, 0
      %s38 = sadd.s32 %s37, 1
      %s39 = scalar_select %p36, %s37, %s38
      %p42 = pneg %p36
      %p43 = scmp.eq.s32.totalorder %s15, 1
      %p44 = por %p42, %p43
      %p45 = scmp.ne.s32.totalorder %s37, %s40
      %p46 = scmp.eq.s32.totalorder %s15, 0
      %p47 = por %p45, %p46
      %p48 = scmp.ne.s32.totalorder %s37, %s40
      %p49 = scmp.eq.s32.totalorder %s20, 1
      %p50 = por %p48, %p49
      %p51 = scmp.ne.s32.totalorder %s40, %s41
      %p52 = scmp.eq.s32.totalorder %s20, 0
      %p53 = por %p51, %p52
      %p54 = scmp.ne.s32.totalorder %s40, %s41
      %p55 = scmp.eq.s32.totalorder %s21, 1
      %p56 = por %p54, %p55
      %p58 = scmp.ne.s32.totalorder %s41, %s57
      %p59 = scmp.eq.s32.totalorder %s21, 0
      %p60 = por %p58, %p59
      %s61 = ssub.s32 %s23, %s30
      %p62 = scmp.eq.s32.totalorder %s61, 0
      %s64 = sadd.s32 %s63, 1
      %s65 = scalar_select %p62, %s63, %s64
      %p68 = pneg %p62
      %p69 = scmp.eq.s32.totalorder %s15, 1
      %p70 = por %p68, %p69
      %p71 = scmp.ne.s32.totalorder %s63, %s66
      %p72 = scmp.eq.s32.totalorder %s15, 0
      %p73 = por %p71, %p72
      %p74 = scmp.ne.s32.totalorder %s63, %s66
      %p75 = scmp.eq.s32.totalorder %s20, 1
      %p76 = por %p74, %p75
      %p77 = scmp.ne.s32.totalorder %s66, %s67
      %p78 = scmp.eq.s32.totalorder %s20, 0
      %p79 = por %p77, %p78
      %p80 = scmp.ne.s32.totalorder %s66, %s67
      %p81 = scmp.eq.s32.totalorder %s21, 1
      %p82 = por %p80, %p81
      %p84 = scmp.ne.s32.totalorder %s67, %s83
      %p85 = scmp.eq.s32.totalorder %s21, 0
      %p86 = por %p84, %p85
      %s87 = ssub.s32 %s22, %s34
      %s88 = ssub.s32 %s23, %s30
      %s89 = sor.u32 %s87, %s88
      %p90 = scmp.eq.s32.totalorder %s89, 0
      %s92 = sadd.s32 %s91, 1
      %s93 = scalar_select %p90, %s91, %s92
      %p96 = pneg %p90
      %p97 = scmp.eq.s32.totalorder %s15, 1
      %p98 = por %p96, %p97
      %p99 = scmp.ne.s32.totalorder %s91, %s94
      %p100 = scmp.eq.s32.totalorder %s15, 0
      %p101 = por %p99, %p100
      %p102 = scmp.ne.s32.totalorder %s91, %s94
      %p103 = scmp.eq.s32.totalorder %s20, 1
      %p104 = por %p102, %p103
      %p105 = scmp.ne.s32.totalorder %s94, %s95
      %p106 = scmp.eq.s32.totalorder %s20, 0
      %p107 = por %p105, %p106
      %p108 = scmp.ne.s32.totalorder %s94, %s95
      %p109 = scmp.eq.s32.totalorder %s21, 1
      %p110 = por %p108, %p109
      %p112 = scmp.ne.s32.totalorder %s95, %s111
      %p113 = scmp.eq.s32.totalorder %s21, 0
      %p114 = por %p112, %p113
      %p115 = scmp.le.s32.totalorder 1, %s15
      %p116 = scmp.lt.s32.totalorder %s15, 3
      %p117 = pnand %p115, %p116
      %p118 = pneg %p117
      // Predicated region
      $region9: #{tpu_custom_call.1} parent=5 // pred_check
        _
      $region10: #{tpu_custom_call.1} parent=5 // pred_check_branch
        %120 = sbr.rel (%p117) target = $region12
      $region11: #{tpu_custom_call.1} parent=5 // pred_region
        %s121 = ssub.s32 %s15, 1
        // Predicated region
        $region13: #{tpu_custom_call.1} parent=11 // pred_check
          %p122 = pneg %p53
        $region14: #{tpu_custom_call.1} parent=11 // pred_check_branch
          %124 = sbr.rel (%p122) target = $region16
        $region15: #{tpu_custom_call.1} parent=11 // pred_region
          %s126 = ssub.s32 128, 128
          %127 = vsyncadd [#allocation3], %s126
          %s128 = smul.addr %s24, 128
          %s129 = scalar_lea.hbm %s0, %s128
          %s131 = sshll.u32 [#allocation2], 4
          %s132 = int_to_ptr.vmem [resolvable:$true] %s131
          %134 = dma.hbm_to_vmem [thread:$0]  %s129, 128, %s132, [#allocation3]
        $region16: #{tpu_custom_call.1} parent=11 // pred_fallthru
          _
      $region12: #{tpu_custom_call.1} parent=5 // pred_fallthru
        _
      %p135 = scmp.lt.s32.totalorder %s15, 2
      // Predicated region
      $region17: #{tpu_custom_call.1} parent=5 // pred_check
        %p136 = pneg %p135
      $region18: #{tpu_custom_call.1} parent=5 // pred_check_branch
        %138 = sbr.rel (%p136) target = $region20
      $region19: #{tpu_custom_call.1} parent=5 // pred_region
        // Predicated region
        $region21: #{tpu_custom_call.1} parent=19 // pred_check
          %p139 = pneg %p73
        $region22: #{tpu_custom_call.1} parent=19 // pred_check_branch
          %141 = sbr.rel (%p139) target = $region24
        $region23: #{tpu_custom_call.1} parent=19 // pred_region
          %s142 = sand.u32 %s63, 1
          %s143 = scalar_lea.sflag [#allocation6], %s142
          %s144 = sand.u32 %s63, 1
          %s145 = scalar_lea.vmem [#allocation5], %s144
          %s147 = ssub.s32 16, 16
          %148 = vsyncadd %s143, %s147
          %s149 = smul.addr %s23, 16
          %s150 = scalar_lea.hbm %s1, %s149
          %s152 = sshll.u32 %s145, 4
          %s153 = int_to_ptr.vmem [resolvable:$true] %s152
          %155 = dma.hbm_to_vmem [thread:$0]  %s150, 16, %s153, %s143
        $region24: #{tpu_custom_call.1} parent=19 // pred_fallthru
          _
      $region20: #{tpu_custom_call.1} parent=5 // pred_fallthru
        _
      %p156 = scmp.le.s32.totalorder 1, %s15
      %p157 = scmp.lt.s32.totalorder %s15, 3
      %p158 = pnand %p156, %p157
      %p159 = pneg %p158
      // Predicated region
      $region25: #{tpu_custom_call.1} parent=5 // pred_check
        _
      $region26: #{tpu_custom_call.1} parent=5 // pred_check_branch
        %161 = sbr.rel (%p158) target = $region28
      $region27: #{tpu_custom_call.1} parent=5 // pred_region
        %s162 = ssub.s32 %s15, 1
        // Predicated region
        $region29: #{tpu_custom_call.1} parent=27 // pred_check
          %p163 = pneg %p53
        $region30: #{tpu_custom_call.1} parent=27 // pred_check_branch
          %165 = sbr.rel (%p163) target = $region32
        $region31: #{tpu_custom_call.1} parent=27 // pred_region
          %166 = dma.done [#allocation3], 128
        $region32: #{tpu_custom_call.1} parent=27 // pred_fallthru
          _
        %s167 = sand.u32 %s66, 1
        %s168 = scalar_lea.sflag [#allocation6], %s167
        %s169 = sand.u32 %s66, 1
        %s170 = scalar_lea.vmem [#allocation5], %s169
        // Predicated region
        $region33: #{tpu_custom_call.1} parent=27 // pred_check
          %p171 = pneg %p79
        $region34: #{tpu_custom_call.1} parent=27 // pred_check_branch
          %173 = sbr.rel (%p171) target = $region36
        $region35: #{tpu_custom_call.1} parent=27 // pred_region
          %174 = dma.done %s168, 16
        $region36: #{tpu_custom_call.1} parent=27 // pred_fallthru
          _
        %p175 = pneg %p53
        %p176 = pneg %p50
        %s177 = sand.u32 %s66, 1
        %s178 = scalar_lea.sflag [#allocation6], %s177
        %s179 = sand.u32 %s66, 1
        %s180 = scalar_lea.vmem [#allocation5], %s179
        %p181 = pneg %p79
        %p182 = pneg %p76
        %p183 = pneg %p107
        %p184 = pneg %p104
        %s185 = sand.u32 %s94, 1
        %s186 = scalar_lea.sflag [#allocation4], %s185
        %s187 = sand.u32 %s94, 1
        %s188 = smul.addr %s187, 8
        %s189 = scalar_lea.vmem [#allocation7], %s188
        %v190 = vld [vmem:[#allocation2] sm:$0xff]
        %v191 = vld [vmem:[%s170] sm:$0x1]
        %193 = vset.pattern.permute.xlu0 3
        %194 = vperm.xlu0 %193, %v190
        %v195 = vpop.permute.xlu0 %194
        %v198 = vlaneseq
        %v199 = vshrl.u32 %v198, 7
        %v200 = vsub.s32 0, %v199
        %v201 = vrot.slane %v191, %v200
        %v203 = vsub.f32 %v195, %v201
        %v204 = vmul.f32 %v203, %v203
        %205 = vset.pattern.permute.xlu0 2
        %206 = vperm.xlu0 %205, %v190
        %v207 = vpop.permute.xlu0 %206
        %v209 = vmul.f32 %v204, %v207
        %210 = vset.pattern.permute.xlu0 4
        %211 = vperm.xlu0 %210, %v190
        %v212 = vpop.permute.xlu0 %211
        %v214 = vadd.f32 %v209, %v212
        %v215 = vmul.f32 %v209, %v214
        %216 = vset.pattern.permute.xlu0 5
        %217 = vperm.xlu0 %216, %v190
        %v218 = vpop.permute.xlu0 %217
        %v220 = vadd.f32 %v215, %v218
        %v221 = vrcp.pop %v220
        %v222 = vmul.f32 %v220, %v221
        %v223 = vsub.f32 2.0, %v222
        %v224 = vmul.f32 %v221, %v223
        %225 = vset.pattern.permute.xlu0 1
        %226 = vperm.xlu0 %225, %v190
        %v227 = vpop.permute.xlu0 %226
        %v229 = vmul.f32 %v227, %v209
        %230 = vset.pattern.permute.xlu0 6
        %231 = vperm.xlu0 %230, %v190
        %v232 = vpop.permute.xlu0 %231
        %v234 = vadd.f32 %v229, %v232
        %v235 = vmul.f32 %v234, %v224
        %236 = vset.pattern.permute.xlu0 0
        %237 = vperm.xlu0 %236, %v190
        %v238 = vpop.permute.xlu0 %237
        %v240 = vsub.f32 %v238, %v235
        %241 = vst [vmem:[%s189] sm:$0xff] %v240
        %s242 = sand.u32 %s94, 1
        %s243 = scalar_lea.sflag [#allocation4], %s242
        %s244 = sand.u32 %s94, 1
        %s245 = smul.addr %s244, 8
        %s246 = scalar_lea.vmem [#allocation7], %s245
        // Predicated region
        $region37: #{tpu_custom_call.1} parent=27 // pred_check
          %p247 = pneg %p104
        $region38: #{tpu_custom_call.1} parent=27 // pred_check_branch
          %249 = sbr.rel (%p247) target = $region40
        $region39: #{tpu_custom_call.1} parent=27 // pred_region
          %s251 = ssub.s32 128, 128
          %252 = vsyncadd %s243, %s251
          %s253 = smul.addr %s24, 2
          %s254 = sadd.s32 %s25, %s253
          %s255 = smul.addr %s254, 128
          %s256 = scalar_lea.hbm %s2, %s255
          %s258 = sshll.u32 %s246, 4
          %s259 = int_to_ptr.vmem [resolvable:$true] %s258
          %261 = dma.vmem_to_hbm [thread:$0]  %s259, 128, %s256, %s243
        $region40: #{tpu_custom_call.1} parent=27 // pred_fallthru
          _
      $region28: #{tpu_custom_call.1} parent=5 // pred_fallthru
        _
      %p262 = scmp.le.s32.totalorder 2, %s15
      // Predicated region
      $region41: #{tpu_custom_call.1} parent=5 // pred_check
        %p263 = pneg %p262
      $region42: #{tpu_custom_call.1} parent=5 // pred_check_branch
        %265 = sbr.rel (%p263) target = $region44
      $region43: #{tpu_custom_call.1} parent=5 // pred_region
        %s266 = ssub.s32 %s15, 2
        // Predicated region
        $region45: #{tpu_custom_call.1} parent=43 // pred_check
          %p267 = pneg %p110
        $region46: #{tpu_custom_call.1} parent=43 // pred_check_branch
          %269 = sbr.rel (%p267) target = $region48
        $region47: #{tpu_custom_call.1} parent=43 // pred_region
          %s270 = sand.u32 %s95, 1
          %s271 = scalar_lea.sflag [#allocation4], %s270
          %s272 = sand.u32 %s95, 1
          %s273 = smul.addr %s272, 8
          %s274 = scalar_lea.vmem [#allocation7], %s273
          %275 = dma.done %s271, 128
        $region48: #{tpu_custom_call.1} parent=43 // pred_fallthru
          _
      $region44: #{tpu_custom_call.1} parent=5 // pred_fallthru
        _
    $region6: #{tpu_custom_call.1} parent=1 // loop_footer
      %s19 = sadd.s32 1, %s15
    $region7: #{tpu_custom_call.1} parent=1 // loop_footer_branch
      %14 = sbr.rel target = $region3
    $region8: #{tpu_custom_call.1} parent=1 // loop_exit
      _
    %276 = vsyncpa [#allocation3], 1
    %s277 = scalar_lea.sflag [#allocation3], 1
    %278 = vsyncpa %s277, 1
    %279 = vsyncpa [#allocation6], 1
    %s280 = scalar_lea.sflag [#allocation6], 1
    %281 = vsyncpa %s280, 1
    %282 = vsyncpa [#allocation4], 1
    %s283 = scalar_lea.sflag [#allocation4], 1
    %284 = vsyncpa %s283, 1

</llo_original>
